<compile_context>
chip_gen: v7x
topology: tpu7x:2x2x1
jax: 0.10.0
libtpu: 0.0.40
codegen_flags: <defaults>
</compile_context>

<pallas_src>
import functools

import jax
import jax.numpy as jnp
from jax import lax
from jax.experimental import pallas as pl
from jax.experimental.pallas import tpu as pltpu


def _truncation_kernel(x_ref, avg_ref, o_ref, *, max_layer, threshold,
                       block_layers):
    x = x_ref[...]            # (b_block, l_block, D)
    avg = avg_ref[...]        # (1, 1, D)

    # lerp(avg, x, t) = t*x + (1-t)*avg.  The (1-t)*avg term is evaluated once
    # on the small (1, 1, D) tile and broadcast by the add; avg appears only
    # once (no duplicated broadcast_in_dim).
    interp = threshold * x + (1.0 - threshold) * avg

    if block_layers > max_layer:
        # Only when max_layer is not sublane-aligned: pass the padding layers
        # inside this block through unchanged.
        layer_idx = lax.broadcasted_iota(jnp.int32, x.shape, 1)
        interp = jnp.where(layer_idx < max_layer, interp, x)

    o_ref[...] = interp.astype(o_ref.dtype)


def truncation(x, avg_latent, *, max_layer=8, threshold=0.7):
    """x: (B, L, D) float; avg_latent: (D,). Returns truncated dlatents."""
    assert x.ndim == 3
    B, L, D = x.shape
    if max_layer <= 0:
        return x  # pure pass-through, nothing to compute

    # Only the first `max_layer` layers are touched.  Round the block's layer
    # extent up to a multiple of 8 sublanes (f32) for dense stores, clamped to
    # the full layer dim (full-extent blocks are always legal).
    l_block = min(L, ((max_layer + 7) // 8) * 8)

    # Batch rows per block: target ~1 MiB of f32 per buffer (measured sweet
    # spot for mem-bound elementwise tiles; safely inside every chip's scoped
    # VMEM with double buffering), but keep >= 2 grid steps when B > 1 so v7x
    # can shard the "parallel" axis across both TensorCores.
    target_rows = max(8, (1 << 20) // (D * 4))
    b_block = max(1, min(B, target_rows // l_block))
    if B > 1:
        b_block = min(b_block, pl.cdiv(B, 2))
    grid_b = pl.cdiv(B, b_block)

    avg3d = avg_latent.reshape(1, 1, D).astype(x.dtype)

    kernel = functools.partial(
        _truncation_kernel,
        max_layer=max_layer,
        threshold=float(threshold),
        block_layers=l_block,
    )

    return pl.pallas_call(
        kernel,
        out_shape=jax.ShapeDtypeStruct((B, L, D), x.dtype),
        grid_spec=pltpu.PrefetchScalarGridSpec(
            num_scalar_prefetch=0,
            grid=(grid_b,),
            in_specs=[
                pl.BlockSpec((b_block, l_block, D), lambda b: (b, 0, 0)),
                pl.BlockSpec((1, 1, D), lambda b: (0, 0, 0)),
            ],
            out_specs=pl.BlockSpec((b_block, l_block, D), lambda b: (b, 0, 0)),
        ),
        # Alias x to the output: layers >= l_block are never DMA'd and keep
        # x's contents automatically.
        input_output_aliases={0: 0},
        compiler_params=pltpu.CompilerParams(
            dimension_semantics=("parallel",),
        ),
    )(x, avg3d)


def _reference(x, avg_latent, max_layer, threshold):
    interp = avg_latent[None, None, :] + threshold * (x - avg_latent[None, None, :])
    mask = (jnp.arange(x.shape[1]) < max_layer)[None, :, None]
    return jnp.where(mask, interp, x)


if __name__ == "__main__":
    key = jax.random.PRNGKey(0)
    k_x, k_avg = jax.random.split(key)

    B, L, D = 2, 10, 128       # batch, num style layers, latent dim
    x = jax.random.normal(k_x, (B, L, D), dtype=jnp.float32)
    avg_latent = jax.random.normal(k_avg, (D,), dtype=jnp.float32)

    ok = True
    # Cover: sublane-aligned max_layer, unaligned max_layer (mask path), and
    # max_layer >= L (full truncation, full-extent layer block).
    for max_layer, threshold in [(8, 0.7), (5, 0.7), (12, 0.3)]:
        out = truncation(x, avg_latent, max_layer=max_layer, threshold=threshold)
        out = jax.block_until_ready(out)
        ref = _reference(x, avg_latent, max_layer, threshold)
        assert out.shape == (B, L, D)
        ok &= bool(jnp.allclose(out, ref, atol=1e-5, rtol=1e-5))
    assert ok, "mismatch vs reference"

    print("KERNEL_OK")
</pallas_src>

<mosaic_0001>
module attributes {stable_mosaic.version = 11 : i64} {
  func.func @_truncation_kernel(%arg0: i32, %arg1: memref<1x8x128xf32, #tpu.memory_space<vmem>>, %arg2: memref<1x1x128xf32, #tpu.memory_space<vmem>>, %arg3: memref<1x8x128xf32, #tpu.memory_space<vmem>>) attributes {dimension_semantics = [#tpu.dimension_semantics<parallel>], iteration_bounds = array<i64: 2>, scalar_prefetch = 0 : i64, scratch_operands = 0 : i64, tpu.core_type = #tpu.core_type<tc>, window_params = [{transform_indices = @transform_0, window_bounds = array<i64: 1, 8, 128>}, {pipeline_mode = #tpu.pipeline_mode<synchronous>, transform_indices = @transform_1, window_bounds = array<i64: 1, 1, 128>}, {transform_indices = @transform_2, window_bounds = array<i64: 1, 8, 128>}]} {
    %c0 = arith.constant 0 : index
    %c0_0 = arith.constant 0 : index
    %c0_1 = arith.constant 0 : index
    %0 = vector.load %arg1[%c0, %c0_0, %c0_1] : memref<1x8x128xf32, #tpu.memory_space<vmem>>, vector<1x8x128xf32>
    %c0_2 = arith.constant 0 : index
    %c0_3 = arith.constant 0 : index
    %c0_4 = arith.constant 0 : index
    %1 = vector.load %arg2[%c0_2, %c0_3, %c0_4] : memref<1x1x128xf32, #tpu.memory_space<vmem>>, vector<1x1x128xf32>
    %cst = arith.constant 0.699999988 : f32
    %2 = vector.broadcast %cst : f32 to vector<1x8x128xf32>
    %3 = arith.mulf %2, %0 : vector<1x8x128xf32>
    %cst_5 = arith.constant 3.000000e-01 : f32
    %4 = vector.broadcast %cst_5 : f32 to vector<1x1x128xf32>
    %5 = arith.mulf %4, %1 : vector<1x1x128xf32>
    %6 = vector.broadcast %5 : vector<1x1x128xf32> to vector<1x8x128xf32>
    %7 = arith.addf %3, %6 : vector<1x8x128xf32>
    %c0_6 = arith.constant 0 : index
    %c0_7 = arith.constant 0 : index
    %c0_8 = arith.constant 0 : index
    %8 = vector.load %arg3[%c0_6, %c0_7, %c0_8] : memref<1x8x128xf32, #tpu.memory_space<vmem>>, vector<1x8x128xf32>
    tpu.vector_store %arg3[%c0_6, %c0_7, %c0_8], %7 {strides = array<i32>} : memref<1x8x128xf32, #tpu.memory_space<vmem>>, vector<1x8x128xf32>,
    return
  }
  func.func @transform_0(%arg0: i32) -> (i32, i32, i32) {
    %c0_i32 = arith.constant 0 : i32
    %c0_i32_0 = arith.constant 0 : i32
    %c0_i32_1 = arith.constant 0 : i32
    return %arg0, %c0_i32, %c0_i32_0 : i32, i32, i32
  }
  func.func @transform_1(%arg0: i32) -> (i32, i32, i32) {
    %c0_i32 = arith.constant 0 : i32
    %c0_i32_0 = arith.constant 0 : i32
    %c0_i32_1 = arith.constant 0 : i32
    %c0_i32_2 = arith.constant 0 : i32
    return %c0_i32, %c0_i32_0, %c0_i32_1 : i32, i32, i32
  }
  func.func @transform_2(%arg0: i32) -> (i32, i32, i32) {
    %c0_i32 = arith.constant 0 : i32
    %c0_i32_0 = arith.constant 0 : i32
    %c0_i32_1 = arith.constant 0 : i32
    return %arg0, %c0_i32, %c0_i32_0 : i32, i32, i32
  }
}

</mosaic_0001>

<llo_original>
// kernel: tpu_custom_call.1
$region0: #{tpu_custom_call.1}
  #allocation0 [shape = 'u32[]', space=smem, size = 0x4, offset = 0x4, fixed_abs, tag = 'smem constant byte address 0x4 - core index']
  #allocation1 [shape = 'u32[144,128]{1,0:T(1,128)}', space=vmem, size = 0x12000, scoped, tag = 'internal scratch']
  %s0 = inlined_call_operand.vmem [shape: f32[2,10,128], index: 0, kind: input, shape index: {}, may-alias: {0,2}]
  %s1 = inlined_call_operand.vmem [shape: f32[1,1,128], index: 1, kind: input, shape index: {}]
  %s2 = inlined_call_operand.vmem [shape: f32[2,10,128], index: 2, kind: output, shape index: {}, may-alias: {0,2}]
  %s3 = sld [smem:[#allocation0]]
  $region41: #{tpu_custom_call.1} parent=0
    _
  %s5 = ssub.s32 1, %s3
  %s6 = scalar_select 0, %s5, %s3
  loop: start=0, step=1, limit=4
  $region2: #{tpu_custom_call.1} parent=0 // loop_pre_header
    _
  $region3: #{tpu_custom_call.1} parent=0 // loop_header
    %s8 = sphi 0, %s12
    %p9 = scmp.ge.s32.totalorder %s8, 4
    %s18 = sphi 0, %s20
    %s21 = sphi 0, %s18
    %s22 = sphi 0, %s21
    %s38 = sphi 0, %s22
    %s42 = sphi 0, %s42
    %s44 = sphi 0, %s42
    %s45 = sphi 0, %s44
    %s59 = sphi 0, %s45
    %s65 = sphi 0, %s67
    %s68 = sphi 0, %s65
    %s69 = sphi 0, %s68
    %s85 = sphi 0, %s69
  $region4: #{tpu_custom_call.1} parent=0 // loop_header_branch
    %11 = sbr.rel (%p9) target = $region8
  $region5: #{tpu_custom_call.1} parent=0 // loop_body
    %s13 = ssub.s32 %s8, 1
    %s14 = ssub.s32 %s8, 2
    %s15 = sadd.s32 %s8, 1
    %s16 = ssub.s32 %s8, %s15
    %p17 = scmp.eq.s32.totalorder %s16, 0
    %s19 = sadd.s32 %s18, 1
    %s20 = scalar_select %p17, %s18, %s19
    %p23 = pneg %p17
    %p24 = scmp.eq.s32.totalorder %s8, 1
    %p25 = por %p23, %p24
    %p26 = scmp.ne.s32.totalorder %s18, %s21
    %p27 = scmp.eq.s32.totalorder %s8, 0
    %p28 = por %p26, %p27
    %p29 = scmp.ne.s32.totalorder %s18, %s21
    %p30 = scmp.eq.s32.totalorder %s13, 1
    %p31 = por %p29, %p30
    %p32 = scmp.ne.s32.totalorder %s21, %s22
    %p33 = scmp.eq.s32.totalorder %s13, 0
    %p34 = por %p32, %p33
    %p35 = scmp.ne.s32.totalorder %s21, %s22
    %p36 = scmp.eq.s32.totalorder %s14, 1
    %p37 = por %p35, %p36
    %p39 = scmp.ne.s32.totalorder %s22, %s38
    %p40 = scmp.eq.s32.totalorder %s14, 0
    %p41 = por %p39, %p40
    %s43 = sadd.s32 %s42, 1
    %p46 = scmp.eq.s32.totalorder %s8, 1
    %p47 = scmp.ne.s32.totalorder %s42, %s44
    %p48 = scmp.eq.s32.totalorder %s8, 0
    %p49 = por %p47, %p48
    %p50 = scmp.ne.s32.totalorder %s42, %s44
    %p51 = scmp.eq.s32.totalorder %s13, 1
    %p52 = por %p50, %p51
    %p53 = scmp.ne.s32.totalorder %s44, %s45
    %p54 = scmp.eq.s32.totalorder %s13, 0
    %p55 = por %p53, %p54
    %p56 = scmp.ne.s32.totalorder %s44, %s45
    %p57 = scmp.eq.s32.totalorder %s14, 1
    %p58 = por %p56, %p57
    %p60 = scmp.ne.s32.totalorder %s45, %s59
    %p61 = scmp.eq.s32.totalorder %s14, 0
    %p62 = por %p60, %p61
    %s63 = ssub.s32 %s8, %s15
    %p64 = scmp.eq.s32.totalorder %s63, 0
    %s66 = sadd.s32 %s65, 1
    %s67 = scalar_select %p64, %s65, %s66
    %p70 = pneg %p64
    %p71 = scmp.eq.s32.totalorder %s8, 1
    %p72 = por %p70, %p71
    %p73 = scmp.ne.s32.totalorder %s65, %s68
    %p74 = scmp.eq.s32.totalorder %s8, 0
    %p75 = por %p73, %p74
    %p76 = scmp.ne.s32.totalorder %s65, %s68
    %p77 = scmp.eq.s32.totalorder %s13, 1
    %p78 = por %p76, %p77
    %p79 = scmp.ne.s32.totalorder %s68, %s69
    %p80 = scmp.eq.s32.totalorder %s13, 0
    %p81 = por %p79, %p80
    %p82 = scmp.ne.s32.totalorder %s68, %s69
    %p83 = scmp.eq.s32.totalorder %s14, 1
    %p84 = por %p82, %p83
    %p86 = scmp.ne.s32.totalorder %s69, %s85
    %p87 = scmp.eq.s32.totalorder %s14, 0
    %p88 = por %p86, %p87
    %p89 = scmp.le.s32.totalorder 1, %s8
    %p90 = scmp.lt.s32.totalorder %s8, 3
    %p91 = pnand %p89, %p90
    %p92 = pneg %p91
    // Predicated region
    $region9: #{tpu_custom_call.1} parent=5 // pred_check
      _
    $region10: #{tpu_custom_call.1} parent=5 // pred_check_branch
      %94 = sbr.rel (%p91) target = $region12
    $region11: #{tpu_custom_call.1} parent=5 // pred_region
      %s95 = ssub.s32 %s8, 1
      // Predicated region
      $region13: #{tpu_custom_call.1} parent=11 // pred_check
        %p96 = pneg %p55
      $region14: #{tpu_custom_call.1} parent=11 // pred_check_branch
        %98 = sbr.rel (%p96) target = $region16
      $region15: #{tpu_custom_call.1} parent=11 // pred_region
        _
      $region16: #{tpu_custom_call.1} parent=11 // pred_fallthru
        _
    $region12: #{tpu_custom_call.1} parent=5 // pred_fallthru
      _
    %p99 = scmp.lt.s32.totalorder %s8, 2
    // Predicated region
    $region17: #{tpu_custom_call.1} parent=5 // pred_check
      %p100 = pneg %p99
    $region18: #{tpu_custom_call.1} parent=5 // pred_check_branch
      %102 = sbr.rel (%p100) target = $region20
    $region19: #{tpu_custom_call.1} parent=5 // pred_region
      // Predicated region
      $region21: #{tpu_custom_call.1} parent=19 // pred_check
        %p103 = pneg %p28
      $region22: #{tpu_custom_call.1} parent=19 // pred_check_branch
        %105 = sbr.rel (%p103) target = $region24
      $region23: #{tpu_custom_call.1} parent=19 // pred_region
        %p106 = scmp.lt.s32.totalorder %s8, 1
        %s107 = scalar_select %p106, %s8, 1
        %s108 = smul.addr %s107, 2
        %s109 = smul.addr %s108, 8
        %s110 = scalar_lea.vmem %s0, %s109
      $region24: #{tpu_custom_call.1} parent=19 // pred_fallthru
        _
    $region20: #{tpu_custom_call.1} parent=5 // pred_fallthru
      _
    %p111 = scmp.le.s32.totalorder 1, %s8
    %p112 = scmp.lt.s32.totalorder %s8, 3
    %p113 = pnand %p111, %p112
    %p114 = pneg %p113
    // Predicated region
    $region25: #{tpu_custom_call.1} parent=5 // pred_check
      _
    $region26: #{tpu_custom_call.1} parent=5 // pred_check_branch
      %116 = sbr.rel (%p113) target = $region28
    $region27: #{tpu_custom_call.1} parent=5 // pred_region
      %s117 = ssub.s32 %s8, 1
      %p118 = scmp.lt.s32.totalorder %s13, 1
      %s119 = scalar_select %p118, %s13, 1
      %s120 = smul.addr %s119, 2
      %s121 = smul.addr %s120, 8
      %s122 = scalar_lea.vmem %s0, %s121
      %p123 = pneg %p34
      %p124 = pneg %p31
      %p125 = pneg %p55
      %p126 = pneg %p52
      %p127 = pneg %p81
      %p128 = pneg %p78
      %p129 = scmp.lt.s32.totalorder %s13, 1
      %s130 = scalar_select %p129, %s13, 1
      %s131 = smul.addr %s130, 2
      %s132 = smul.addr %s131, 8
      %s133 = scalar_lea.vmem %s2, %s132
      %p134 = scmp.lt.s32.totalorder %s13, 1
      %s135 = scalar_select %p134, %s13, 1
      %s136 = smul.addr %s135, 2
      %s137 = smul.addr %s136, 8
      %s138 = scalar_lea.vmem %s0, %s137
      %p139 = scmp.lt.s32.totalorder %s13, 1
      %s140 = scalar_select %p139, %s13, 1
      %s141 = smul.addr %s140, 2
      %s142 = smul.addr %s141, 8
      %s143 = scalar_lea.vmem %s2, %s142
      %v144 = vld [vmem:[%s138] sm:$0xff]
      %v145 = vld [vmem:[%s1] sm:$0x1]
      %v146 = vmul.f32 %v144, 0.7
      %v147 = vmul.f32 %v145, 0.3
      %v149 = vlaneseq
      %v150 = vshrl.u32 %v149, 7
      %v151 = vsub.s32 0, %v150
      %v152 = vrot.slane %v147, %v151
      %v154 = vadd.f32 %v146, %v152
      %155 = vst [vmem:[%s143] sm:$0xff] %v154
      %p156 = scmp.lt.s32.totalorder %s13, 1
      %s157 = scalar_select %p156, %s13, 1
      %s158 = smul.addr %s157, 2
      %s159 = smul.addr %s158, 8
      %s160 = scalar_lea.vmem %s2, %s159
      // Predicated region
      $region29: #{tpu_custom_call.1} parent=27 // pred_check
        %p161 = pneg %p78
      $region30: #{tpu_custom_call.1} parent=27 // pred_check_branch
        %163 = sbr.rel (%p161) target = $region32
      $region31: #{tpu_custom_call.1} parent=27 // pred_region
        _
      $region32: #{tpu_custom_call.1} parent=27 // pred_fallthru
        _
    $region28: #{tpu_custom_call.1} parent=5 // pred_fallthru
      _
    %p164 = scmp.le.s32.totalorder 2, %s8
    // Predicated region
    $region33: #{tpu_custom_call.1} parent=5 // pred_check
      %p165 = pneg %p164
    $region34: #{tpu_custom_call.1} parent=5 // pred_check_branch
      %167 = sbr.rel (%p165) target = $region36
    $region35: #{tpu_custom_call.1} parent=5 // pred_region
      %s168 = ssub.s32 %s8, 2
      // Predicated region
      $region37: #{tpu_custom_call.1} parent=35 // pred_check
        %p169 = pneg %p84
      $region38: #{tpu_custom_call.1} parent=35 // pred_check_branch
        %171 = sbr.rel (%p169) target = $region40
      $region39: #{tpu_custom_call.1} parent=35 // pred_region
        %p172 = scmp.lt.s32.totalorder %s14, 1
        %s173 = scalar_select %p172, %s14, 1
        %s174 = smul.addr %s173, 2
        %s175 = smul.addr %s174, 8
        %s176 = scalar_lea.vmem %s2, %s175
      $region40: #{tpu_custom_call.1} parent=35 // pred_fallthru
        _
    $region36: #{tpu_custom_call.1} parent=5 // pred_fallthru
      _
  $region6: #{tpu_custom_call.1} parent=0 // loop_footer
    %s12 = sadd.s32 1, %s8
  $region7: #{tpu_custom_call.1} parent=0 // loop_footer_branch
    %7 = sbr.rel target = $region3
  $region8: #{tpu_custom_call.1} parent=0 // loop_exit
    _

</llo_original>
